<compile_context>
chip_gen: v6e
topology: v6e:2x2x1
jax: 0.10.0
libtpu: 0.0.40
codegen_flags: <defaults>
</compile_context>

<pallas_src>
import jax
import jax.numpy as jnp
from jax.experimental import pallas as pl
from jax.experimental.pallas import tpu as pltpu

HIDDEN_LAYER = 64
IN_DIM = 4
MID_DIM = 16
OUT_DIM = 2

# Parameter slab layout (row bands are 16-sublane aligned for bf16 packing):
#   rows [ 0, 64): W1 (64, 4)  in cols [0, 4)   | b1 in rows [ 0, 64)
#   rows [64, 80): W2 (16, 64) in cols [0, 64)  | b2 in rows [64, 80)
#   rows [80, 96): W3 rows [80, 82) in cols [0, 16) | b3 rows [80, 82)
SLAB_ROWS = 96
SLAB_COLS = 64
_R1, _R2, _R3 = 0, 64, 80


# ---------------------------------------------------------------------------
# Per-chip static configuration (safe fallbacks everywhere).
# ---------------------------------------------------------------------------
def _device_kind():
    try:
        return jax.devices()[0].device_kind.lower()
    except Exception:  # pragma: no cover - defensive
        return ""


_KIND = _device_kind()
# bf16 VPU epilogue only on v6e / v7x; v5e (and older) keep the f32 epilogue.
_BF16_EPILOGUE = any(t in _KIND for t in ("v6", "v7", "7x"))
# Larger tile cap where the bf16 epilogue shrinks live intermediates.
_TILE_CAP = 16384 if _BF16_EPILOGUE else 8192
# v7x has 2 TensorCores per chip: keep >= 2 grid steps so "parallel" helps.
_MIN_STEPS = 2 if ("v7" in _KIND or "7x" in _KIND) else 1


def _round_up(n, m):
    return ((n + m - 1) // m) * m


def _choose_tiling(batch):
    """Adaptive batch tiling: minimal 128-padding, capped tile, >=2 steps on v7x."""
    b128 = _round_up(max(int(batch), 1), 128)
    steps = max(pl.cdiv(b128, _TILE_CAP), _MIN_STEPS)
    steps = max(1, min(steps, b128 // 128))        # keep tile_b >= 128
    tile_b = _round_up(pl.cdiv(b128, steps), 128)
    b_pad = steps * tile_b
    # Guard: last block dim must be a multiple of 128 (or the full dim).
    assert tile_b % 128 == 0 and b_pad % tile_b == 0, (tile_b, b_pad)
    return tile_b, b_pad


# ---------------------------------------------------------------------------
# Kernel
# ---------------------------------------------------------------------------
def _make_mlp_kernel(bf16_epilogue: bool):
    def epilogue(acc_f32, bias_f32):
        if bf16_epilogue:
            # v6e/v7x: one downcast of the accumulator, then bf16 add/max.
            return jnp.maximum(acc_f32.astype(jnp.bfloat16)
                               + bias_f32.astype(jnp.bfloat16), 0.0)
        # v5e: f32 add/max (no bf16 VPU), re-quantize for the next MXU matmul.
        return jnp.maximum(acc_f32 + bias_f32, 0.0).astype(jnp.bfloat16)

    def kernel(x_ref, w_ref, b_ref, o_ref):
        # x_ref : (IN_DIM, TILE_B)        bf16, streamed per grid step
        # w_ref : (SLAB_ROWS, SLAB_COLS)  bf16, VMEM-resident across the grid
        # b_ref : (SLAB_ROWS, 1)          f32,  VMEM-resident across the grid
        # o_ref : (OUT_DIM, TILE_B)       f32,  lane-dense stores
        x = x_ref[...]

        w1 = w_ref[_R1:_R2, 0:IN_DIM]                 # (64, 4)
        w2 = w_ref[_R2:_R3, 0:HIDDEN_LAYER]           # (16, 64)
        w3 = w_ref[_R3:_R3 + OUT_DIM, 0:MID_DIM]      # (2, 16)  (real rows only)

        b1 = b_ref[_R1:_R2, :]                        # (64, 1)
        b2 = b_ref[_R2:_R3, :]                        # (16, 1)
        b3 = b_ref[_R3:_R3 + OUT_DIM, :]              # (2, 1)

        # Layer 1: bf16 MXU matmul, f32 accumulate.
        h1 = epilogue(jnp.dot(w1, x, preferred_element_type=jnp.float32), b1)
        # Layer 2
        h2 = epilogue(jnp.dot(w2, h1, preferred_element_type=jnp.float32), b2)
        # Layer 3: only the 2 real output rows; final bias-add stays f32.
        o = jnp.dot(w3, h2, preferred_element_type=jnp.float32) + b3
        o_ref[...] = o.astype(o_ref.dtype)

    return kernel


_MLP_KERNEL = _make_mlp_kernel(_BF16_EPILOGUE)


# ---------------------------------------------------------------------------
# Wrappers
# ---------------------------------------------------------------------------
def network_forward_fm(x_t, w_slab, b_slab):
    """Feature-major fast path.

    x_t: (IN_DIM, B) bf16 (store the replay batch in this layout upstream to
    avoid any wrapper-side transpose/cast HBM passes).  Returns (OUT_DIM, B)
    float32 Q-values.
    """
    batch = x_t.shape[1]
    tile_b, b_pad = _choose_tiling(batch)
    if b_pad != batch:
        x_t = jnp.pad(x_t, ((0, 0), (0, b_pad - batch)))

    flops = 2 * b_pad * (IN_DIM * HIDDEN_LAYER
                         + HIDDEN_LAYER * MID_DIM
                         + MID_DIM * OUT_DIM)
    bytes_accessed = (IN_DIM * b_pad * 2            # bf16 activation stream in
                      + OUT_DIM * b_pad * 4         # f32 output stream
                      + SLAB_ROWS * SLAB_COLS * 2   # bf16 weight slab (once)
                      + SLAB_ROWS * 4)              # f32 bias slab (once)

    out_t = pl.pallas_call(
        _MLP_KERNEL,
        out_shape=jax.ShapeDtypeStruct((OUT_DIM, b_pad), jnp.float32),
        grid=(b_pad // tile_b,),
        in_specs=[
            pl.BlockSpec((IN_DIM, tile_b), lambda i: (0, i)),        # streamed
            pl.BlockSpec((SLAB_ROWS, SLAB_COLS), lambda i: (0, 0)),  # resident
            pl.BlockSpec((SLAB_ROWS, 1), lambda i: (0, 0)),          # resident
        ],
        out_specs=pl.BlockSpec((OUT_DIM, tile_b), lambda i: (0, i)),
        compiler_params=pltpu.CompilerParams(
            # Batch axis is embarrassingly parallel -> both TCs on v7x.
            dimension_semantics=("parallel",),
            # Max tile keeps live intermediates < ~10 MiB; 32 MiB fits the
            # scoped default on every generation incl. v7x (64 MiB physical).
            vmem_limit_bytes=32 * 1024 * 1024,
        ),
        cost_estimate=pl.CostEstimate(
            flops=flops, transcendentals=0, bytes_accessed=bytes_accessed),
    )(x_t, w_slab, b_slab)

    return out_t[:, :batch]


@jax.jit
def network_forward(x, w_slab, b_slab):
    """PyTorch-shaped entry point: x (B, 4) float -> (B, 2) float32 Q-values."""
    x_t = jnp.transpose(x).astype(jnp.bfloat16)
    out_t = network_forward_fm(x_t, w_slab, b_slab)
    return jnp.transpose(out_t)


# ---------------------------------------------------------------------------
# Parameters, packing, reference
# ---------------------------------------------------------------------------
def init_params(key):
    """PyTorch nn.Linear default init, weights in PyTorch (out, in) layout."""
    keys = jax.random.split(key, 6)

    def linear_init(kw, kb, fan_in, fan_out):
        bound = 1.0 / (fan_in ** 0.5)
        w = jax.random.uniform(kw, (fan_out, fan_in), jnp.float32, -bound, bound)
        b = jax.random.uniform(kb, (fan_out,), jnp.float32, -bound, bound)
        return w, b

    w1, b1 = linear_init(keys[0], keys[1], IN_DIM, HIDDEN_LAYER)
    w2, b2 = linear_init(keys[2], keys[3], HIDDEN_LAYER, MID_DIM)
    w3, b3 = linear_init(keys[4], keys[5], MID_DIM, OUT_DIM)
    return w1, b1, w2, b2, w3, b3


def pack_params(w1, b1, w2, b2, w3, b3):
    """Pack all 6 parameter arrays into one bf16 weight slab + one f32 bias slab."""
    w_slab = jnp.zeros((SLAB_ROWS, SLAB_COLS), jnp.float32)
    w_slab = w_slab.at[_R1:_R2, 0:IN_DIM].set(w1)
    w_slab = w_slab.at[_R2:_R3, 0:HIDDEN_LAYER].set(w2)
    w_slab = w_slab.at[_R3:_R3 + OUT_DIM, 0:MID_DIM].set(w3)

    b_slab = jnp.zeros((SLAB_ROWS, 1), jnp.float32)
    b_slab = b_slab.at[_R1:_R2, 0].set(b1)
    b_slab = b_slab.at[_R2:_R3, 0].set(b2)
    b_slab = b_slab.at[_R3:_R3 + OUT_DIM, 0].set(b3)
    return w_slab.astype(jnp.bfloat16), b_slab


def reference_forward(x, w1, b1, w2, b2, w3, b3):
    """Pure-JAX reference mirroring the kernel's quantization points.

    bf16 inputs/weights, f32 MXU accumulation; epilogue in bf16 on v6e/v7x and
    in f32 on v5e, exactly as the kernel does.  (DQN Q-values tolerate bf16.)
    """
    rb = lambda a: a.astype(jnp.bfloat16)
    a1 = jnp.dot(rb(x), rb(w1).T, preferred_element_type=jnp.float32)
    if _BF16_EPILOGUE:
        h1 = jnp.maximum(rb(a1) + rb(b1), 0.0)
    else:
        h1 = rb(jnp.maximum(a1 + b1, 0.0))
    a2 = jnp.dot(h1, rb(w2).T, preferred_element_type=jnp.float32)
    if _BF16_EPILOGUE:
        h2 = jnp.maximum(rb(a2) + rb(b2), 0.0)
    else:
        h2 = rb(jnp.maximum(a2 + b2, 0.0))
    return jnp.dot(h2, rb(w3).T, preferred_element_type=jnp.float32) + b3


if __name__ == "__main__":
    key = jax.random.PRNGKey(0)
    k_params, k_x = jax.random.split(key)

    params = init_params(k_params)
    w_slab, b_slab = pack_params(*params)

    tol = 5e-3 if _BF16_EPILOGUE else 1e-3
    # A tiny batch (exercises 128-padding) and a replay-buffer-style batch
    # (not a multiple of the tile -> exercises adaptive tiling / multi-step).
    for batch in (5, 1000):
        kx = jax.random.fold_in(k_x, batch)
        x = jax.random.normal(kx, (batch, IN_DIM), dtype=jnp.float32)

        out = jax.block_until_ready(network_forward(x, w_slab, b_slab))
        ref = reference_forward(x, *params)

        assert out.shape == (batch, OUT_DIM), out.shape
        max_err = float(jnp.max(jnp.abs(out - ref.astype(jnp.float32))))
        assert jnp.allclose(out, ref.astype(jnp.float32), atol=tol, rtol=tol), (
            f"mismatch at batch={batch}, max_err={max_err}")

    print("KERNEL_OK")
</pallas_src>

<mosaic_0001>
module attributes {stable_mosaic.version = 11 : i64} {
  func.func @kernel(%arg0: i32, %arg1: memref<4x128xbf16, #tpu.memory_space<vmem>>, %arg2: memref<96x64xbf16, #tpu.memory_space<vmem>>, %arg3: memref<96x1xf32, #tpu.memory_space<vmem>>, %arg4: memref<2x128xf32, #tpu.memory_space<vmem>>) attributes {dimension_semantics = [#tpu.dimension_semantics<parallel>], iteration_bounds = array<i64: 1>, scalar_prefetch = 0 : i64, scratch_operands = 0 : i64, tpu.core_type = #tpu.core_type<tc>, window_params = [{transform_indices = @transform_0, window_bounds = array<i64: 4, 128>}, {pipeline_mode = #tpu.pipeline_mode<synchronous>, transform_indices = @transform_1, window_bounds = array<i64: 96, 64>}, {pipeline_mode = #tpu.pipeline_mode<synchronous>, transform_indices = @transform_2, window_bounds = array<i64: 96, 1>}, {transform_indices = @transform_3, window_bounds = array<i64: 2, 128>}]} {
    %c0 = arith.constant 0 : index
    %c0_0 = arith.constant 0 : index
    %0 = vector.load %arg1[%c0, %c0_0] : memref<4x128xbf16, #tpu.memory_space<vmem>>, vector<4x128xbf16>
    %c0_1 = arith.constant 0 : index
    %c0_2 = arith.constant 0 : index
    %1 = vector.load %arg2[%c0_1, %c0_2] : memref<96x64xbf16, #tpu.memory_space<vmem>>, vector<64x4xbf16>
    %c64 = arith.constant 64 : index
    %c0_3 = arith.constant 0 : index
    %2 = vector.load %arg2[%c64, %c0_3] : memref<96x64xbf16, #tpu.memory_space<vmem>>, vector<16x64xbf16>
    %c80 = arith.constant 80 : index
    %c0_4 = arith.constant 0 : index
    %3 = vector.load %arg2[%c80, %c0_4] : memref<96x64xbf16, #tpu.memory_space<vmem>>, vector<2x16xbf16>
    %c0_5 = arith.constant 0 : index
    %c0_6 = arith.constant 0 : index
    %4 = vector.load %arg3[%c0_5, %c0_6] : memref<96x1xf32, #tpu.memory_space<vmem>>, vector<64x1xf32>
    %c64_7 = arith.constant 64 : index
    %c0_8 = arith.constant 0 : index
    %5 = vector.load %arg3[%c64_7, %c0_8] : memref<96x1xf32, #tpu.memory_space<vmem>>, vector<16x1xf32>
    %c80_9 = arith.constant 80 : index
    %c0_10 = arith.constant 0 : index
    %6 = vector.load %arg3[%c80_9, %c0_10] : memref<96x1xf32, #tpu.memory_space<vmem>>, vector<2x1xf32>
    %cst = arith.constant dense<0.000000e+00> : vector<64x128xf32>
    %7 = tpu.matmul %1, %0, %cst {dimension_numbers = #tpu.dot_dimension_numbers<[1], [0], [0], [1], [0, 0, 1, 1], [], []>} : vector<64x4xbf16>, vector<4x128xbf16>, vector<64x128xf32> -> vector<64x128xf32>
    %8 = vector.broadcast %4 : vector<64x1xf32> to vector<64x128xf32>
    %9 = arith.addf %7, %8 : vector<64x128xf32>
    %cst_11 = arith.constant 0.000000e+00 : f32
    %10 = vector.broadcast %cst_11 : f32 to vector<64x128xf32>
    %11 = arith.maximumf %9, %10 : vector<64x128xf32>
    %12 = arith.truncf %11 : vector<64x128xf32> to vector<64x128xbf16>
    %cst_12 = arith.constant dense<0.000000e+00> : vector<16x128xf32>
    %13 = tpu.matmul %2, %12, %cst_12 {dimension_numbers = #tpu.dot_dimension_numbers<[1], [0], [0], [1], [0, 0, 1, 1], [], []>} : vector<16x64xbf16>, vector<64x128xbf16>, vector<16x128xf32> -> vector<16x128xf32>
    %14 = vector.broadcast %5 : vector<16x1xf32> to vector<16x128xf32>
    %15 = arith.addf %13, %14 : vector<16x128xf32>
    %cst_13 = arith.constant 0.000000e+00 : f32
    %16 = vector.broadcast %cst_13 : f32 to vector<16x128xf32>
    %17 = arith.maximumf %15, %16 : vector<16x128xf32>
    %18 = arith.truncf %17 : vector<16x128xf32> to vector<16x128xbf16>
    %cst_14 = arith.constant dense<0.000000e+00> : vector<2x128xf32>
    %19 = tpu.matmul %3, %18, %cst_14 {dimension_numbers = #tpu.dot_dimension_numbers<[1], [0], [0], [1], [0, 0, 1, 1], [], []>} : vector<2x16xbf16>, vector<16x128xbf16>, vector<2x128xf32> -> vector<2x128xf32>
    %20 = vector.broadcast %6 : vector<2x1xf32> to vector<2x128xf32>
    %21 = arith.addf %19, %20 : vector<2x128xf32>
    %c0_15 = arith.constant 0 : index
    %c0_16 = arith.constant 0 : index
    %22 = vector.load %arg4[%c0_15, %c0_16] : memref<2x128xf32, #tpu.memory_space<vmem>>, vector<2x128xf32>
    tpu.vector_store %arg4[%c0_15, %c0_16], %21 {strides = array<i32>} : memref<2x128xf32, #tpu.memory_space<vmem>>, vector<2x128xf32>,
    return
  }
  func.func @transform_0(%arg0: i32) -> (i32, i32) {
    %c0_i32 = arith.constant 0 : i32
    %c0_i32_0 = arith.constant 0 : i32
    return %c0_i32, %arg0 : i32, i32
  }
  func.func @transform_1(%arg0: i32) -> (i32, i32) {
    %c0_i32 = arith.constant 0 : i32
    %c0_i32_0 = arith.constant 0 : i32
    %c0_i32_1 = arith.constant 0 : i32
    return %c0_i32, %c0_i32_0 : i32, i32
  }
  func.func @transform_2(%arg0: i32) -> (i32, i32) {
    %c0_i32 = arith.constant 0 : i32
    %c0_i32_0 = arith.constant 0 : i32
    %c0_i32_1 = arith.constant 0 : i32
    return %c0_i32, %c0_i32_0 : i32, i32
  }
  func.func @transform_3(%arg0: i32) -> (i32, i32) {
    %c0_i32 = arith.constant 0 : i32
    %c0_i32_0 = arith.constant 0 : i32
    return %c0_i32, %arg0 : i32, i32
  }
}

</mosaic_0001>

<llo_original>
// kernel: network_forward.1
$region0: #{network_forward.1}
  #allocation0 [shape = 'u32[]', space=smem, size = 0x4, offset = 0x4, fixed_abs, tag = 'smem constant byte address 0x4 - core index']
  #allocation1 [shape = 'u32[144,128]{1,0:T(1,128)}', space=vmem, size = 0x12000, scoped, tag = 'internal scratch']
  %s0 = inlined_call_operand.vmem [shape: bf16[4,128], index: 0, kind: input, shape index: {}]
  %s1 = inlined_call_operand.vmem [shape: bf16[96,64], index: 1, kind: input, shape index: {}]
  %s2 = inlined_call_operand.vmem [shape: f32[96,1], index: 2, kind: input, shape index: {}]
  %s3 = inlined_call_operand.vmem [shape: f32[2,128], index: 3, kind: output, shape index: {}]
  %s4 = sld [smem:[#allocation0]]
  $region22: #{network_forward.1} parent=0
    _
  %s6 = ssub.s32 1, %s4
  %s7 = scalar_select 0, %s6, %s4
  // Predicated region
  $region2: #{network_forward.1} parent=0 // pred_check
    _
  $region3: #{network_forward.1} parent=0 // pred_check_branch
    %9 = sbr.rel (0) target = $region5
  $region4: #{network_forward.1} parent=0 // pred_region
    _
  $region5: #{network_forward.1} parent=0 // pred_fallthru
    _
  // Predicated region
  $region6: #{network_forward.1} parent=0 // pred_check
    _
  $region7: #{network_forward.1} parent=0 // pred_check_branch
    %11 = sbr.rel (0) target = $region9
  $region8: #{network_forward.1} parent=0 // pred_region
    _
  $region9: #{network_forward.1} parent=0 // pred_fallthru
    _
  // Predicated region
  $region10: #{network_forward.1} parent=0 // pred_check
    _
  $region11: #{network_forward.1} parent=0 // pred_check_branch
    %13 = sbr.rel (0) target = $region13
  $region12: #{network_forward.1} parent=0 // pred_region
    _
  $region13: #{network_forward.1} parent=0 // pred_fallthru
    _
  %v15 = vld [vmem:[%s0] sm:$0x3]
  %v16 = vld [vmem:[%s1] sm:$0xf]
  %v17 = vld [vmem:[%s1 + $0x4] sm:$0xf]
  %v18 = vld [vmem:[%s1 + $0x8] sm:$0xf]
  %v19 = vld [vmem:[%s1 + $0xc] sm:$0xf]
  %v20 = vld [vmem:[%s1 + $0x10] sm:$0xf]
  %v21 = vld [vmem:[%s1 + $0x14] sm:$0xf]
  %v22 = vld [vmem:[%s1 + $0x18] sm:$0xf]
  %v23 = vld [vmem:[%s1 + $0x1c] sm:$0xf]
  %v24 = vld [vmem:[%s1 + $0x20] sm:$0xf]
  %v25 = vld [vmem:[%s1 + $0x24] sm:$0xf]
  %v26 = vld [vmem:[%s1 + $0x28] sm:$0x1]
  %v27 = vld [vmem:[%s2] sm:$0xff]
  %v28 = vld [vmem:[%s2 + $0x8] sm:$0xff]
  %v29 = vld [vmem:[%s2 + $0x10] sm:$0xff]
  %v30 = vld [vmem:[%s2 + $0x18] sm:$0xff]
  %v31 = vld [vmem:[%s2 + $0x20] sm:$0xff]
  %v32 = vld [vmem:[%s2 + $0x28] sm:$0xff]
  %v33 = vld [vmem:[%s2 + $0x30] sm:$0xff]
  %v34 = vld [vmem:[%s2 + $0x38] sm:$0xff]
  %v35 = vld [vmem:[%s2 + $0x40] sm:$0xff]
  %v36 = vld [vmem:[%s2 + $0x48] sm:$0xff]
  %v37 = vld [vmem:[%s2 + $0x50] sm:$0x3]
  %39 = vset.pattern.permute.xlu0 0
  %40 = vperm.xlu0 %39, %v27
  %v41 = vpop.permute.xlu0 %40
  %44 = vset.pattern.permute.xlu0 0
  %45 = vperm.xlu0 %44, %v28
  %v46 = vpop.permute.xlu0 %45
  %49 = vset.pattern.permute.xlu0 0
  %50 = vperm.xlu0 %49, %v29
  %v51 = vpop.permute.xlu0 %50
  %54 = vset.pattern.permute.xlu0 0
  %55 = vperm.xlu0 %54, %v30
  %v56 = vpop.permute.xlu0 %55
  %59 = vset.pattern.permute.xlu0 0
  %60 = vperm.xlu0 %59, %v31
  %v61 = vpop.permute.xlu0 %60
  %64 = vset.pattern.permute.xlu0 0
  %65 = vperm.xlu0 %64, %v32
  %v66 = vpop.permute.xlu0 %65
  %69 = vset.pattern.permute.xlu0 0
  %70 = vperm.xlu0 %69, %v33
  %v71 = vpop.permute.xlu0 %70
  %74 = vset.pattern.permute.xlu0 0
  %75 = vperm.xlu0 %74, %v34
  %v76 = vpop.permute.xlu0 %75
  %v86 = vunpack.c.l.b16 %v16
  %v87 = vunpack.c.l.b16 %v17
  %v88 = vunpack.c.l.b16 %v18
  %v89 = vunpack.c.l.b16 %v19
  %v90 = vunpack.c.l.b16 %v20
  %v91 = vunpack.c.l.b16 %v21
  %v92 = vunpack.c.l.b16 %v22
  %v93 = vunpack.c.l.b16 %v23
  %v94 = vpack.c.b16 %v87, %v86
  %v95 = vpack.c.b16 %v89, %v88
  %v96 = vpack.c.b16 %v91, %v90
  %v97 = vpack.c.b16 %v93, %v92
  %vm98 = vcmask 31744
  %v100 = vsel %vm98, %v94, 0
  %v103 = vsel %vm98, %v95, 0
  %v106 = vsel %vm98, %v96, 0
  %v109 = vsel %vm98, %v97, 0
  %vm111 = vcmask 1041408
  %v113 = vsel %vm111, %v15, 0
  %115 = vmatprep.subr.bf16.mxu0 0
  %116 = vmatpush1.bf16.msra.mxu0 0
  %117 = vmatprep.subr.bf16.mxu0 0
  %118 = vmatpush1.bf16.msra.mxu0 0
  %119 = vmatprep.subr.bf16.mxu0 0
  %120 = vmatpush1.bf16.msra.mxu0 0
  %121 = vmatprep.subr.bf16.mxu0 0
  %122 = vmatpush1.bf16.msra.mxu0 0
  %123 = vmatprep.subr.bf16.mxu0 0
  %124 = vmatpush1.bf16.msra.mxu0 0
  %125 = vmatprep.subr.bf16.mxu0 0
  %126 = vmatpush1.bf16.msra.mxu0 0
  %127 = vmatprep.subr.bf16.mxu0 0
  %128 = vmatpush1.bf16.msra.mxu0 0
  %129 = vmatprep.subr.bf16.mxu0 0
  %130 = vmatpush1.bf16.msra.mxu0 %v113
  %131 = vmatprep.subr.bf16.mxu0 0
  %132 = vmatpush2.bf16.msra.mxu0 0
  %133 = vmatprep.subr.bf16.mxu0 0
  %134 = vmatpush2.bf16.msra.mxu0 0
  %135 = vmatprep.subr.bf16.mxu0 0
  %136 = vmatpush2.bf16.msra.mxu0 0
  %137 = vmatprep.subr.bf16.mxu0 0
  %138 = vmatpush2.bf16.msra.mxu0 0
  %139 = vmatprep.subr.bf16.mxu0 0
  %140 = vmatpush2.bf16.msra.mxu0 0
  %141 = vmatprep.subr.bf16.mxu0 0
  %142 = vmatpush2.bf16.msra.mxu0 0
  %143 = vmatprep.subr.bf16.mxu0 0
  %144 = vmatpush2.bf16.msra.mxu0 0
  %145 = vmatprep.subr.bf16.mxu0 0
  %146 = vmatpush2.bf16.msra.mxu0 0
  %147 = vmatprep.mubr.bf16.mxu0 0
  %148 = vmatmul.mubr.bf16.gmra.mxu0 %v100
  %v149 = vpop.f32.mrf.mxu0
  %v150 = vadd.f32 %v41, %v149
  %v151 = vpop.f32.mrf.mxu0
  %v152 = vpop.f32.mrf.mxu0
  %v153 = vadd.f32 %v46, %v152
  %v154 = vpop.f32.mrf.mxu0
  %155 = vmatprep.mubr.bf16.mxu0 0
  %156 = vmatmul.mubr.bf16.gmra.mxu0 %v103
  %v157 = vpop.f32.mrf.mxu0
  %v158 = vadd.f32 %v51, %v157
  %v159 = vpop.f32.mrf.mxu0
  %v160 = vpop.f32.mrf.mxu0
  %v161 = vadd.f32 %v56, %v160
  %v162 = vpop.f32.mrf.mxu0
  %163 = vmatprep.mubr.bf16.mxu0 0
  %164 = vmatmul.mubr.bf16.gmra.mxu0 %v106
  %v165 = vpop.f32.mrf.mxu0
  %v166 = vadd.f32 %v61, %v165
  %v167 = vpop.f32.mrf.mxu0
  %v168 = vpop.f32.mrf.mxu0
  %v169 = vadd.f32 %v66, %v168
  %v170 = vpop.f32.mrf.mxu0
  %171 = vmatprep.mubr.bf16.mxu0 0
  %172 = vmatmul.mubr.bf16.gmra.mxu0 %v109
  %v173 = vpop.f32.mrf.mxu0
  %v174 = vadd.f32 %v71, %v173
  %v175 = vpop.f32.mrf.mxu0
  %v176 = vpop.f32.mrf.mxu0
  %v177 = vadd.f32 %v76, %v176
  %v178 = vpop.f32.mrf.mxu0
  %179 = vdwg.mxu0
  %v180 = vmax.f32 %v150, 0.0
  %v181 = vmax.f32 %v153, 0.0
  %v182 = vmax.f32 %v158, 0.0
  %v183 = vmax.f32 %v161, 0.0
  %v184 = vmax.f32 %v166, 0.0
  %v185 = vmax.f32 %v169, 0.0
  %v186 = vmax.f32 %v174, 0.0
  %v187 = vmax.f32 %v177, 0.0
  %v188 = vpack.c.bf16 %v181, %v180
  %v189 = vpack.c.bf16 %v183, %v182
  %v190 = vpack.c.bf16 %v185, %v184
  %v191 = vpack.c.bf16 %v187, %v186
  %193 = vset.pattern.permute.xlu0 0
  %194 = vperm.xlu0 %193, %v35
  %v195 = vpop.permute.xlu0 %194
  %198 = vset.pattern.permute.xlu0 0
  %199 = vperm.xlu0 %198, %v36
  %v200 = vpop.permute.xlu0 %199
  %v204 = vunpack.c.l.b16 %v24
  %v205 = vunpack.c.l.b16 %v25
  %v206 = vpack.c.b16 %v205, %v204
  %vm207 = vcmask 523264
  %v209 = vsel %vm207, %v206, 0
  %211 = vmatprep.subr.bf16.mxu0 0
  %212 = vmatpush1.bf16.msra.mxu0 0
  %213 = vmatprep.subr.bf16.mxu0 0
  %214 = vmatpush1.bf16.msra.mxu0 0
  %215 = vmatprep.subr.bf16.mxu0 0
  %216 = vmatpush1.bf16.msra.mxu0 0
  %217 = vmatprep.subr.bf16.mxu0 0
  %218 = vmatpush1.bf16.msra.mxu0 0
  %219 = vmatprep.subr.bf16.mxu0 0
  %220 = vmatpush1.bf16.msra.mxu0 %v191
  %221 = vmatprep.subr.bf16.mxu0 0
  %222 = vmatpush1.bf16.msra.mxu0 %v190
  %223 = vmatprep.subr.bf16.mxu0 0
  %224 = vmatpush1.bf16.msra.mxu0 %v189
  %225 = vmatprep.subr.bf16.mxu0 0
  %226 = vmatpush1.bf16.msra.mxu0 %v188
  %227 = vmatprep.subr.bf16.mxu0 0
  %228 = vmatpush2.bf16.msra.mxu0 0
  %229 = vmatprep.subr.bf16.mxu0 0
  %230 = vmatpush2.bf16.msra.mxu0 0
  %231 = vmatprep.subr.bf16.mxu0 0
  %232 = vmatpush2.bf16.msra.mxu0 0
  %233 = vmatprep.subr.bf16.mxu0 0
  %234 = vmatpush2.bf16.msra.mxu0 0
  %235 = vmatprep.subr.bf16.mxu0 0
  %236 = vmatpush2.bf16.msra.mxu0 0
  %237 = vmatprep.subr.bf16.mxu0 0
  %238 = vmatpush2.bf16.msra.mxu0 0
  %239 = vmatprep.subr.bf16.mxu0 0
  %240 = vmatpush2.bf16.msra.mxu0 0
  %241 = vmatprep.subr.bf16.mxu0 0
  %242 = vmatpush2.bf16.msra.mxu0 0
  %243 = vmatprep.mubr.bf16.mxu0 0
  %244 = vmatmul.mubr.bf16.gmra.mxu0 %v209
  %v245 = vpop.f32.mrf.mxu0
  %v246 = vadd.f32 %v195, %v245
  %v247 = vpop.f32.mrf.mxu0
  %v248 = vpop.f32.mrf.mxu0
  %v249 = vadd.f32 %v200, %v248
  %v250 = vpop.f32.mrf.mxu0
  %251 = vdwg.mxu0
  %v252 = vmax.f32 %v246, 0.0
  %v253 = vmax.f32 %v249, 0.0
  %v254 = vpack.c.bf16 %v253, %v252
  %256 = vset.pattern.permute.xlu0 0
  %257 = vperm.xlu0 %256, %v37
  %v258 = vpop.permute.xlu0 %257
  %vm260 = vcmask 130048
  %v262 = vsel %vm260, %v26, 0
  %264 = vmatprep.subr.bf16.mxu0 0
  %265 = vmatpush1.bf16.msra.mxu0 0
  %266 = vmatprep.subr.bf16.mxu0 0
  %267 = vmatpush1.bf16.msra.mxu0 0
  %268 = vmatprep.subr.bf16.mxu0 0
  %269 = vmatpush1.bf16.msra.mxu0 0
  %270 = vmatprep.subr.bf16.mxu0 0
  %271 = vmatpush1.bf16.msra.mxu0 0
  %272 = vmatprep.subr.bf16.mxu0 0
  %273 = vmatpush1.bf16.msra.mxu0 0
  %274 = vmatprep.subr.bf16.mxu0 0
  %275 = vmatpush1.bf16.msra.mxu0 0
  %276 = vmatprep.subr.bf16.mxu0 0
  %277 = vmatpush1.bf16.msra.mxu0 0
  %278 = vmatprep.subr.bf16.mxu0 0
  %279 = vmatpush1.bf16.msra.mxu0 %v254
  %280 = vmatprep.subr.bf16.mxu0 0
  %281 = vmatpush2.bf16.msra.mxu0 0
  %282 = vmatprep.subr.bf16.mxu0 0
  %283 = vmatpush2.bf16.msra.mxu0 0
  %284 = vmatprep.subr.bf16.mxu0 0
  %285 = vmatpush2.bf16.msra.mxu0 0
  %286 = vmatprep.subr.bf16.mxu0 0
  %287 = vmatpush2.bf16.msra.mxu0 0
  %288 = vmatprep.subr.bf16.mxu0 0
  %289 = vmatpush2.bf16.msra.mxu0 0
  %290 = vmatprep.subr.bf16.mxu0 0
  %291 = vmatpush2.bf16.msra.mxu0 0
  %292 = vmatprep.subr.bf16.mxu0 0
  %293 = vmatpush2.bf16.msra.mxu0 0
  %294 = vmatprep.subr.bf16.mxu0 0
  %295 = vmatpush2.bf16.msra.mxu0 0
  %296 = vmatprep.mubr.bf16.mxu0 0
  %297 = vmatmul.mubr.bf16.gmra.mxu0 %v262
  %v298 = vpop.f32.mrf.mxu0
  %v299 = vadd.f32 %v258, %v298
  %v300 = vpop.f32.mrf.mxu0
  %v301 = vpop.f32.mrf.mxu0
  %v302 = vpop.f32.mrf.mxu0
  %303 = vdwg.mxu0
  %304 = vst [vmem:[%s3] sm:$0x3] %v299
  // Predicated region
  $region14: #{network_forward.1} parent=0 // pred_check
    _
  $region15: #{network_forward.1} parent=0 // pred_check_branch
    %306 = sbr.rel (0) target = $region17
  $region16: #{network_forward.1} parent=0 // pred_region
    _
  $region17: #{network_forward.1} parent=0 // pred_fallthru
    _
  // Predicated region
  $region18: #{network_forward.1} parent=0 // pred_check
    _
  $region19: #{network_forward.1} parent=0 // pred_check_branch
    %308 = sbr.rel (0) target = $region21
  $region20: #{network_forward.1} parent=0 // pred_region
    _
  $region21: #{network_forward.1} parent=0 // pred_fallthru
    _

</llo_original>
